<compile_context>
chip_gen: v7x
topology: tpu7x:2x2x1
jax: 0.10.0
libtpu: 0.0.40
codegen_flags: <defaults>
</compile_context>

<pallas_src>
import functools

import jax
import jax.numpy as jnp
from jax.experimental import pallas as pl
from jax.experimental.pallas import tpu as pltpu

_LANES = 128          # fused head width (64 actor + 64 critic), one vreg row
_H_SHARED = 32        # shared trunk width
_H_HEAD = 64          # per-head hidden width
_SUB = 16             # bf16 sublane packing (row-alignment unit)


def _round_up(n, m):
    return ((n + m - 1) // m) * m


def _make_kernel(sd_pad: int, action_dim: int):
    """Kernel closure over static sizes (needed for ref slicing / masking)."""

    def kernel(x_ref, w_ref, b_ref, out_ref):
        x = x_ref[...]                               # [TB, sd_pad] bf16

        # Biases: one tiny [3, 128] f32 load, sliced as values.
        b = b_ref[...]
        b_s, b1, b2 = b[0:1, :], b[1:2, :], b[2:3, :]

        # Packed bf16 weight slab (static, 16-row-aligned slices -> free).
        w_s = w_ref[0:sd_pad, :]                     # [sd_pad, 128]
        w1 = w_ref[sd_pad:sd_pad + _LANES, :]        # [128, 128]
        w2 = w_ref[sd_pad + _LANES:sd_pad + 2 * _LANES, :]   # [128, 128]

        # Shared trunk: Linear(state_dim, 32) + ReLU.
        # bf16 x bf16 on the MXU, f32 accumulation; bias/ReLU in f32.
        h = jnp.maximum(
            jnp.dot(x, w_s, preferred_element_type=jnp.float32) + b_s, 0.0
        ).astype(jnp.bfloat16)

        # Fused actor+critic hidden layer: y1[:, :64]=actor, y1[:, 64:]=critic.
        y1 = jnp.maximum(
            jnp.dot(h, w1, preferred_element_type=jnp.float32) + b1, 0.0
        ).astype(jnp.bfloat16)

        # Fused second layer (block-diagonal):
        #   cols 0..A-1 = actor logits, col A = state value, rest = 0.  (f32)
        y2 = jnp.dot(y1, w2, preferred_element_type=jnp.float32) + b2

        # Lane-only actor mask: one (1,128) vreg, broadcasts over batch rows.
        col = jax.lax.broadcasted_iota(jnp.int32, (1, _LANES), 1)
        is_actor = col < action_dim

        # Masked softmax over the actor lanes only (f32 math).
        logits = jnp.where(is_actor, y2, -jnp.inf)
        m = jnp.max(logits, axis=-1, keepdims=True)
        e = jnp.exp(logits - m)                      # padded lanes -> exp(-inf)=0
        s = jnp.sum(e, axis=-1, keepdims=True)
        r = pl.reciprocal(s, approx=True)            # EUP slot (otherwise idle)
        r = r * (2.0 - s * r)                        # Newton step 1
        r = r * (2.0 - s * r)                        # Newton step 2 -> ~f32 acc
        probs = e * r

        # Single lane-dense bf16 output slab: [probs | value | zeros].
        out_ref[...] = jnp.where(is_actor, probs, y2).astype(out_ref.dtype)

    return kernel


def pack_params(p, state_dim: int, action_dim: int):
    """Pack the 10 PyTorch-style weight/bias arrays into 2 lane-dense slabs."""
    # Logits (action_dim lanes) plus the value column must fit in one 128-lane
    # head; the fused hidden widths are fixed by the module (32 / 64).
    assert action_dim + 1 <= _LANES, "action_dim + 1 must be <= 128"
    assert p["w_s"].shape == (state_dim, _H_SHARED)
    assert p["w_a1"].shape == (_H_SHARED, _H_HEAD)
    assert p["w_c1"].shape == (_H_SHARED, _H_HEAD)

    sd_pad = _round_up(state_dim, _SUB)

    w_s = jnp.zeros((sd_pad, _LANES), jnp.float32).at[:state_dim, :_H_SHARED].set(p["w_s"])
    w1 = (jnp.zeros((_LANES, _LANES), jnp.float32)
          .at[:_H_SHARED, :_H_HEAD].set(p["w_a1"])
          .at[:_H_SHARED, _H_HEAD:].set(p["w_c1"]))
    w2 = (jnp.zeros((_LANES, _LANES), jnp.float32)
          .at[:_H_HEAD, :action_dim].set(p["w_a2"])
          .at[_H_HEAD:, action_dim:action_dim + 1].set(p["w_c2"]))
    # bf16 weight slab: MXU-native dtype, halves weight DMA / VMEM.
    w_all = jnp.concatenate([w_s, w1, w2], axis=0).astype(jnp.bfloat16)

    b_s = jnp.zeros((1, _LANES), jnp.float32).at[:, :_H_SHARED].set(p["b_s"])
    b1 = (jnp.zeros((1, _LANES), jnp.float32)
          .at[:, :_H_HEAD].set(p["b_a1"])
          .at[:, _H_HEAD:].set(p["b_c1"]))
    b2 = (jnp.zeros((1, _LANES), jnp.float32)
          .at[:, :action_dim].set(p["b_a2"])
          .at[:, action_dim:action_dim + 1].set(p["b_c2"]))
    b_all = jnp.concatenate([b_s, b1, b2], axis=0)            # [3, 128] f32
    return w_all, b_all


@functools.partial(jax.jit, static_argnames=("action_dim", "block_b"))
def actor_critic_forward(x, w_all, b_all, *, action_dim: int, block_b: int = 2048):
    B, state_dim = x.shape
    sd_pad = w_all.shape[0] - 2 * _LANES

    # Batch tile: bf16-sublane aligned (16), capped at block_b, and split into
    # >=2 grid steps whenever possible so the "parallel" batch axis shards
    # across both v7x TensorCores (harmless elsewhere).
    b_min = _round_up(B, _SUB)
    tb = min(block_b, b_min)
    if b_min >= 2 * _SUB:
        tb = min(tb, _round_up(pl.cdiv(b_min, 2), _SUB))
    b_pad = _round_up(B, tb)

    # Single cast + single fused pad (feature pad + batch pad together).
    x = x.astype(jnp.bfloat16)
    pad_b, pad_f = b_pad - B, sd_pad - state_dim
    if pad_b or pad_f:
        x = jnp.pad(x, ((0, pad_b), (0, pad_f)))

    # NOTE: w_all / b_all use a constant index_map, so Pallas only fetches them
    # once; pipeline_mode=pl.Buffered(1) would also drop the second resident
    # buffer (~0.25 MB) if VMEM headroom is ever needed for larger batch tiles.
    out = pl.pallas_call(
        _make_kernel(sd_pad, action_dim),
        out_shape=jax.ShapeDtypeStruct((b_pad, _LANES), jnp.bfloat16),
        grid=(b_pad // tb,),
        in_specs=[
            pl.BlockSpec((tb, sd_pad), lambda i: (i, 0)),       # x: batch-tiled
            pl.BlockSpec(w_all.shape, lambda i: (0, 0)),        # weights: resident
            pl.BlockSpec(b_all.shape, lambda i: (0, 0)),        # biases: resident
        ],
        out_specs=pl.BlockSpec((tb, _LANES), lambda i: (i, 0)),
        compiler_params=pltpu.CompilerParams(
            dimension_semantics=("parallel",),                   # megacore on v7x
            vmem_limit_bytes=32 * 1024 * 1024),
    )(x, w_all, b_all)

    # One combined slice of the output slab, then split probs / value.
    head = out[:B, :action_dim + 1].astype(jnp.float32)
    actor_probs = head[:, :action_dim]
    state_val = head[:, action_dim:action_dim + 1]
    return actor_probs, state_val


def init_params(key, state_dim, action_dim):
    # PyTorch-like uniform(-1/sqrt(fan_in), 1/sqrt(fan_in)) init.
    def linear(key, fan_in, fan_out):
        kw, kb = jax.random.split(key)
        bound = 1.0 / jnp.sqrt(fan_in)
        w = jax.random.uniform(kw, (fan_in, fan_out), jnp.float32, -bound, bound)
        b = jax.random.uniform(kb, (1, fan_out), jnp.float32, -bound, bound)
        return w, b

    keys = jax.random.split(key, 5)
    w_s, b_s = linear(keys[0], state_dim, 32)
    w_a1, b_a1 = linear(keys[1], 32, 64)
    w_a2, b_a2 = linear(keys[2], 64, action_dim)
    w_c1, b_c1 = linear(keys[3], 32, 64)
    w_c2, b_c2 = linear(keys[4], 64, 1)
    return dict(w_s=w_s, b_s=b_s,
                w_a1=w_a1, b_a1=b_a1, w_a2=w_a2, b_a2=b_a2,
                w_c1=w_c1, b_c1=b_c1, w_c2=w_c2, b_c2=b_c2)


def reference_forward(x, p):
    """Pure f32 reference (matches the PyTorch module exactly)."""
    h = jnp.maximum(x @ p["w_s"] + p["b_s"], 0.0)
    a = jnp.maximum(h @ p["w_a1"] + p["b_a1"], 0.0)
    probs = jax.nn.softmax(a @ p["w_a2"] + p["b_a2"], axis=1)
    c = jnp.maximum(h @ p["w_c1"] + p["b_c1"], 0.0)
    v = c @ p["w_c2"] + p["b_c2"]
    return probs, v


def reference_forward_mixed(x, p):
    """Mixed-precision reference matching the kernel's bf16-MXU / f32-accum math."""
    bf = lambda a: a.astype(jnp.bfloat16)
    dot = lambda a, b: jnp.dot(bf(a), bf(b), preferred_element_type=jnp.float32)
    h = jnp.maximum(dot(x, p["w_s"]) + p["b_s"], 0.0)
    a = jnp.maximum(dot(h, p["w_a1"]) + p["b_a1"], 0.0)
    probs = jax.nn.softmax(dot(a, p["w_a2"]) + p["b_a2"], axis=1)
    c = jnp.maximum(dot(h, p["w_c1"]) + p["b_c1"], 0.0)
    v = dot(c, p["w_c2"]) + p["b_c2"]
    # Kernel stores its output slab in bf16; round the reference the same way.
    return (probs.astype(jnp.bfloat16).astype(jnp.float32),
            v.astype(jnp.bfloat16).astype(jnp.float32))


if __name__ == "__main__":
    B, state_dim, action_dim = 32, 16, 8
    key = jax.random.PRNGKey(0)
    k_x, k_p = jax.random.split(key)
    x = jax.random.normal(k_x, (B, state_dim), jnp.float32)
    params = init_params(k_p, state_dim, action_dim)
    w_all, b_all = pack_params(params, state_dim, action_dim)

    actor_probs, state_val = actor_critic_forward(
        x, w_all, b_all, action_dim=action_dim)
    jax.block_until_ready((actor_probs, state_val))

    assert actor_probs.shape == (B, action_dim)
    assert state_val.shape == (B, 1)

    # Tight check vs a reference that mirrors the kernel's bf16/f32 mixed math.
    mx_probs, mx_val = reference_forward_mixed(x, params)
    assert jnp.allclose(actor_probs, mx_probs, atol=5e-3, rtol=1e-2)
    assert jnp.allclose(state_val, mx_val, atol=5e-3, rtol=1e-2)

    # Loose check vs the pure-f32 module semantics (bf16 weights/activations).
    f32_probs, f32_val = reference_forward(x, params)
    assert jnp.allclose(actor_probs, f32_probs, atol=3e-2, rtol=3e-2)
    assert jnp.allclose(state_val, f32_val, atol=3e-2, rtol=3e-2)
    assert jnp.allclose(jnp.sum(actor_probs, axis=1), 1.0, atol=1e-2)

    print("KERNEL_OK")
</pallas_src>

<mosaic_0001>
module attributes {stable_mosaic.version = 11 : i64} {
  func.func @kernel(%arg0: i32, %arg1: memref<16x16xbf16, #tpu.memory_space<vmem>>, %arg2: memref<272x128xbf16, #tpu.memory_space<vmem>>, %arg3: memref<3x128xf32, #tpu.memory_space<vmem>>, %arg4: memref<16x128xbf16, #tpu.memory_space<vmem>>) attributes {dimension_semantics = [#tpu.dimension_semantics<parallel>], iteration_bounds = array<i64: 2>, scalar_prefetch = 0 : i64, scratch_operands = 0 : i64, tpu.core_type = #tpu.core_type<tc>, window_params = [{transform_indices = @transform_0, window_bounds = array<i64: 16, 16>}, {pipeline_mode = #tpu.pipeline_mode<synchronous>, transform_indices = @transform_1, window_bounds = array<i64: 272, 128>}, {pipeline_mode = #tpu.pipeline_mode<synchronous>, transform_indices = @transform_2, window_bounds = array<i64: 3, 128>}, {transform_indices = @transform_3, window_bounds = array<i64: 16, 128>}]} {
    %c0 = arith.constant 0 : index
    %c0_0 = arith.constant 0 : index
    %0 = vector.load %arg1[%c0, %c0_0] : memref<16x16xbf16, #tpu.memory_space<vmem>>, vector<16x16xbf16>
    %c0_1 = arith.constant 0 : index
    %c0_2 = arith.constant 0 : index
    %1 = vector.load %arg3[%c0_1, %c0_2] : memref<3x128xf32, #tpu.memory_space<vmem>>, vector<3x128xf32>
    %2 = vector.extract_strided_slice %1 {offsets = [0, 0], sizes = [1, 128], strides = [1, 1]} : vector<3x128xf32> to vector<1x128xf32>
    %3 = vector.extract_strided_slice %1 {offsets = [1, 0], sizes = [1, 128], strides = [1, 1]} : vector<3x128xf32> to vector<1x128xf32>
    %4 = vector.extract_strided_slice %1 {offsets = [2, 0], sizes = [1, 128], strides = [1, 1]} : vector<3x128xf32> to vector<1x128xf32>
    %c0_3 = arith.constant 0 : index
    %c0_4 = arith.constant 0 : index
    %5 = vector.load %arg2[%c0_3, %c0_4] : memref<272x128xbf16, #tpu.memory_space<vmem>>, vector<16x128xbf16>
    %c16 = arith.constant 16 : index
    %c0_5 = arith.constant 0 : index
    %6 = vector.load %arg2[%c16, %c0_5] : memref<272x128xbf16, #tpu.memory_space<vmem>>, vector<128x128xbf16>
    %c144 = arith.constant 144 : index
    %c0_6 = arith.constant 0 : index
    %7 = vector.load %arg2[%c144, %c0_6] : memref<272x128xbf16, #tpu.memory_space<vmem>>, vector<128x128xbf16>
    %cst = arith.constant dense<0.000000e+00> : vector<16x128xf32>
    %8 = tpu.matmul %0, %5, %cst {dimension_numbers = #tpu.dot_dimension_numbers<[1], [0], [0], [1], [0, 0, 1, 1], [], []>} : vector<16x16xbf16>, vector<16x128xbf16>, vector<16x128xf32> -> vector<16x128xf32>
    %9 = vector.broadcast %2 : vector<1x128xf32> to vector<16x128xf32>
    %10 = arith.addf %8, %9 : vector<16x128xf32>
    %cst_7 = arith.constant 0.000000e+00 : f32
    %11 = vector.broadcast %cst_7 : f32 to vector<16x128xf32>
    %12 = arith.maximumf %10, %11 : vector<16x128xf32>
    %13 = arith.truncf %12 : vector<16x128xf32> to vector<16x128xbf16>
    %cst_8 = arith.constant dense<0.000000e+00> : vector<16x128xf32>
    %14 = tpu.matmul %13, %6, %cst_8 {dimension_numbers = #tpu.dot_dimension_numbers<[1], [0], [0], [1], [0, 0, 1, 1], [], []>} : vector<16x128xbf16>, vector<128x128xbf16>, vector<16x128xf32> -> vector<16x128xf32>
    %15 = vector.broadcast %3 : vector<1x128xf32> to vector<16x128xf32>
    %16 = arith.addf %14, %15 : vector<16x128xf32>
    %cst_9 = arith.constant 0.000000e+00 : f32
    %17 = vector.broadcast %cst_9 : f32 to vector<16x128xf32>
    %18 = arith.maximumf %16, %17 : vector<16x128xf32>
    %19 = arith.truncf %18 : vector<16x128xf32> to vector<16x128xbf16>
    %cst_10 = arith.constant dense<0.000000e+00> : vector<16x128xf32>
    %20 = tpu.matmul %19, %7, %cst_10 {dimension_numbers = #tpu.dot_dimension_numbers<[1], [0], [0], [1], [0, 0, 1, 1], [], []>} : vector<16x128xbf16>, vector<128x128xbf16>, vector<16x128xf32> -> vector<16x128xf32>
    %21 = vector.broadcast %4 : vector<1x128xf32> to vector<16x128xf32>
    %22 = arith.addf %20, %21 : vector<16x128xf32>
    %23 = tpu.iota {dimensions = array<i32: 1>} : vector<1x128xi32>
    %c8_i32 = arith.constant 8 : i32
    %24 = vector.broadcast %c8_i32 : i32 to vector<1x128xi32>
    %25 = arith.cmpi slt, %23, %24 : vector<1x128xi32>
    %cst_11 = arith.constant 0xFF800000 : f32
    %26 = vector.shape_cast %25 : vector<1x128xi1> to vector<1x128xi1>
    %27 = vector.broadcast %26 : vector<1x128xi1> to vector<16x128xi1>
    %28 = vector.broadcast %cst_11 : f32 to vector<16x128xf32>
    %29 = arith.select %27, %22, %28 : vector<16x128xi1>, vector<16x128xf32>
    %cst_12 = arith.constant dense<0xFF800000> : vector<16xf32>
    %30 = vector.multi_reduction <maximumf>, %29, %cst_12 [1] : vector<16x128xf32> to vector<16xf32>
    %31 = vector.shape_cast %30 : vector<16xf32> to vector<16x1xf32>
    %32 = vector.broadcast %31 : vector<16x1xf32> to vector<16x128xf32>
    %33 = arith.subf %29, %32 : vector<16x128xf32>
    %34 = math.exp %33 : vector<16x128xf32>
    %cst_13 = arith.constant dense<0.000000e+00> : vector<16xf32>
    %35 = vector.multi_reduction <add>, %34, %cst_13 [1] : vector<16x128xf32> to vector<16xf32>
    %36 = vector.shape_cast %35 : vector<16xf32> to vector<16x1xf32>
    %37 = tpu.reciprocal %36 {approx = true} : vector<16x1xf32> -> vector<16x1xf32>
    %38 = arith.mulf %36, %37 : vector<16x1xf32>
    %cst_14 = arith.constant 2.000000e+00 : f32
    %39 = vector.broadcast %cst_14 : f32 to vector<16x1xf32>
    %40 = arith.subf %39, %38 : vector<16x1xf32>
    %41 = arith.mulf %37, %40 : vector<16x1xf32>
    %42 = arith.mulf %36, %41 : vector<16x1xf32>
    %cst_15 = arith.constant 2.000000e+00 : f32
    %43 = vector.broadcast %cst_15 : f32 to vector<16x1xf32>
    %44 = arith.subf %43, %42 : vector<16x1xf32>
    %45 = arith.mulf %41, %44 : vector<16x1xf32>
    %46 = vector.broadcast %45 : vector<16x1xf32> to vector<16x128xf32>
    %47 = arith.mulf %34, %46 : vector<16x128xf32>
    %48 = vector.shape_cast %25 : vector<1x128xi1> to vector<1x128xi1>
    %49 = vector.broadcast %48 : vector<1x128xi1> to vector<16x128xi1>
    %50 = arith.select %49, %47, %22 : vector<16x128xi1>, vector<16x128xf32>
    %51 = arith.truncf %50 : vector<16x128xf32> to vector<16x128xbf16>
    %c0_16 = arith.constant 0 : index
    %c0_17 = arith.constant 0 : index
    %52 = vector.load %arg4[%c0_16, %c0_17] : memref<16x128xbf16, #tpu.memory_space<vmem>>, vector<16x128xbf16>
    tpu.vector_store %arg4[%c0_16, %c0_17], %51 {strides = array<i32>} : memref<16x128xbf16, #tpu.memory_space<vmem>>, vector<16x128xbf16>,
    return
  }
  func.func @transform_0(%arg0: i32) -> (i32, i32) {
    %c0_i32 = arith.constant 0 : i32
    %c0_i32_0 = arith.constant 0 : i32
    return %arg0, %c0_i32 : i32, i32
  }
  func.func @transform_1(%arg0: i32) -> (i32, i32) {
    %c0_i32 = arith.constant 0 : i32
    %c0_i32_0 = arith.constant 0 : i32
    %c0_i32_1 = arith.constant 0 : i32
    return %c0_i32, %c0_i32_0 : i32, i32
  }
  func.func @transform_2(%arg0: i32) -> (i32, i32) {
    %c0_i32 = arith.constant 0 : i32
    %c0_i32_0 = arith.constant 0 : i32
    %c0_i32_1 = arith.constant 0 : i32
    return %c0_i32, %c0_i32_0 : i32, i32
  }
  func.func @transform_3(%arg0: i32) -> (i32, i32) {
    %c0_i32 = arith.constant 0 : i32
    %c0_i32_0 = arith.constant 0 : i32
    return %arg0, %c0_i32 : i32, i32
  }
}

</mosaic_0001>

<llo_original>
// kernel: actor_critic_forward.1
$region0: #{actor_critic_forward.1}
  #allocation0 [shape = 'u32[]', space=smem, size = 0x4, offset = 0x4, fixed_abs, tag = 'smem constant byte address 0x4 - core index']
  #allocation1 [shape = 'u32[144,128]{1,0:T(1,128)}', space=vmem, size = 0x12000, scoped, tag = 'internal scratch']
  %s0 = inlined_call_operand.vmem [shape: bf16[32,16], index: 0, kind: input, shape index: {}]
  %s1 = inlined_call_operand.hbm [shape: bf16[272,128], index: 1, kind: input, shape index: {}]
  %s2 = inlined_call_operand.vmem [shape: f32[3,128], index: 2, kind: input, shape index: {}]
  %s3 = inlined_call_operand.vmem [shape: bf16[32,128], index: 3, kind: output, shape index: {}]
  %s4 = sld [smem:[#allocation0]]
  $region49: #{actor_critic_forward.1} parent=0
    _
  %s6 = ssub.s32 1, %s4
  %s7 = scalar_select 0, %s6, %s4
  $region1: #{actor_critic_forward.1} parent=0
    #allocation2 [shape = 'u8[69632]{0}', space=vmem, size = 0x11000, scoped, tag = 'input window, operand 1, single buffered']
    #allocation3 [shape = 's32[2]{0}', space=sflag, size = 0x8, scoped, tag = 'scoped memory for actor_critic_forward.1']
    %8 = vsyncpa [#allocation3], 0
    loop: start=0, step=1, limit=4
    $region2: #{actor_critic_forward.1} parent=1 // loop_pre_header
      _
    $region3: #{actor_critic_forward.1} parent=1 // loop_header
      %s10 = sphi 0, %s14
      %p11 = scmp.ge.s32.totalorder %s10, 4
      %s20 = sphi 0, %s22
      %s23 = sphi 0, %s20
      %s24 = sphi 0, %s23
      %s40 = sphi 0, %s24
      %s44 = sphi 0, %s44
      %s46 = sphi 0, %s44
      %s47 = sphi 0, %s46
      %s61 = sphi 0, %s47
      %s65 = sphi 0, %s65
      %s67 = sphi 0, %s65
      %s68 = sphi 0, %s67
      %s82 = sphi 0, %s68
      %s88 = sphi 0, %s90
      %s91 = sphi 0, %s88
      %s92 = sphi 0, %s91
      %s108 = sphi 0, %s92
    $region4: #{actor_critic_forward.1} parent=1 // loop_header_branch
      %13 = sbr.rel (%p11) target = $region8
    $region5: #{actor_critic_forward.1} parent=1 // loop_body
      %s15 = ssub.s32 %s10, 1
      %s16 = ssub.s32 %s10, 2
      %s17 = sadd.s32 %s10, 1
      %s18 = ssub.s32 %s10, %s17
      %p19 = scmp.eq.s32.totalorder %s18, 0
      %s21 = sadd.s32 %s20, 1
      %s22 = scalar_select %p19, %s20, %s21
      %p25 = pneg %p19
      %p26 = scmp.eq.s32.totalorder %s10, 1
      %p27 = por %p25, %p26
      %p28 = scmp.ne.s32.totalorder %s20, %s23
      %p29 = scmp.eq.s32.totalorder %s10, 0
      %p30 = por %p28, %p29
      %p31 = scmp.ne.s32.totalorder %s20, %s23
      %p32 = scmp.eq.s32.totalorder %s15, 1
      %p33 = por %p31, %p32
      %p34 = scmp.ne.s32.totalorder %s23, %s24
      %p35 = scmp.eq.s32.totalorder %s15, 0
      %p36 = por %p34, %p35
      %p37 = scmp.ne.s32.totalorder %s23, %s24
      %p38 = scmp.eq.s32.totalorder %s16, 1
      %p39 = por %p37, %p38
      %p41 = scmp.ne.s32.totalorder %s24, %s40
      %p42 = scmp.eq.s32.totalorder %s16, 0
      %p43 = por %p41, %p42
      %s45 = sadd.s32 %s44, 1
      %p48 = scmp.eq.s32.totalorder %s10, 1
      %p49 = scmp.ne.s32.totalorder %s44, %s46
      %p50 = scmp.eq.s32.totalorder %s10, 0
      %p51 = por %p49, %p50
      %p52 = scmp.ne.s32.totalorder %s44, %s46
      %p53 = scmp.eq.s32.totalorder %s15, 1
      %p54 = por %p52, %p53
      %p55 = scmp.ne.s32.totalorder %s46, %s47
      %p56 = scmp.eq.s32.totalorder %s15, 0
      %p57 = por %p55, %p56
      %p58 = scmp.ne.s32.totalorder %s46, %s47
      %p59 = scmp.eq.s32.totalorder %s16, 1
      %p60 = por %p58, %p59
      %p62 = scmp.ne.s32.totalorder %s47, %s61
      %p63 = scmp.eq.s32.totalorder %s16, 0
      %p64 = por %p62, %p63
      %s66 = sadd.s32 %s65, 1
      %p69 = scmp.eq.s32.totalorder %s10, 1
      %p70 = scmp.ne.s32.totalorder %s65, %s67
      %p71 = scmp.eq.s32.totalorder %s10, 0
      %p72 = por %p70, %p71
      %p73 = scmp.ne.s32.totalorder %s65, %s67
      %p74 = scmp.eq.s32.totalorder %s15, 1
      %p75 = por %p73, %p74
      %p76 = scmp.ne.s32.totalorder %s67, %s68
      %p77 = scmp.eq.s32.totalorder %s15, 0
      %p78 = por %p76, %p77
      %p79 = scmp.ne.s32.totalorder %s67, %s68
      %p80 = scmp.eq.s32.totalorder %s16, 1
      %p81 = por %p79, %p80
      %p83 = scmp.ne.s32.totalorder %s68, %s82
      %p84 = scmp.eq.s32.totalorder %s16, 0
      %p85 = por %p83, %p84
      %s86 = ssub.s32 %s10, %s17
      %p87 = scmp.eq.s32.totalorder %s86, 0
      %s89 = sadd.s32 %s88, 1
      %s90 = scalar_select %p87, %s88, %s89
      %p93 = pneg %p87
      %p94 = scmp.eq.s32.totalorder %s10, 1
      %p95 = por %p93, %p94
      %p96 = scmp.ne.s32.totalorder %s88, %s91
      %p97 = scmp.eq.s32.totalorder %s10, 0
      %p98 = por %p96, %p97
      %p99 = scmp.ne.s32.totalorder %s88, %s91
      %p100 = scmp.eq.s32.totalorder %s15, 1
      %p101 = por %p99, %p100
      %p102 = scmp.ne.s32.totalorder %s91, %s92
      %p103 = scmp.eq.s32.totalorder %s15, 0
      %p104 = por %p102, %p103
      %p105 = scmp.ne.s32.totalorder %s91, %s92
      %p106 = scmp.eq.s32.totalorder %s16, 1
      %p107 = por %p105, %p106
      %p109 = scmp.ne.s32.totalorder %s92, %s108
      %p110 = scmp.eq.s32.totalorder %s16, 0
      %p111 = por %p109, %p110
      %p112 = scmp.le.s32.totalorder 1, %s10
      %p113 = scmp.lt.s32.totalorder %s10, 3
      %p114 = pnand %p112, %p113
      %p115 = pneg %p114
      // Predicated region
      $region9: #{actor_critic_forward.1} parent=5 // pred_check
        _
      $region10: #{actor_critic_forward.1} parent=5 // pred_check_branch
        %117 = sbr.rel (%p114) target = $region12
      $region11: #{actor_critic_forward.1} parent=5 // pred_region
        %s118 = ssub.s32 %s10, 1
        // Predicated region
        $region13: #{actor_critic_forward.1} parent=11 // pred_check
          %p119 = pneg %p57
        $region14: #{actor_critic_forward.1} parent=11 // pred_check_branch
          %121 = sbr.rel (%p119) target = $region16
        $region15: #{actor_critic_forward.1} parent=11 // pred_region
          %s123 = ssub.s32 2176, 2176
          %124 = vsyncadd [#allocation3], %s123
          %s125 = sshll.u32 [#allocation2], 4
          %s126 = int_to_ptr.vmem [resolvable:$true] %s125
          %131 = dma.hbm_to_vmem [thread:$0]  %s1, 2176, %s126, [#allocation3], 64, 64, 4
        $region16: #{actor_critic_forward.1} parent=11 // pred_fallthru
          _
        // Predicated region
        $region17: #{actor_critic_forward.1} parent=11 // pred_check
          %p132 = pneg %p78
        $region18: #{actor_critic_forward.1} parent=11 // pred_check_branch
          %134 = sbr.rel (%p132) target = $region20
        $region19: #{actor_critic_forward.1} parent=11 // pred_region
          _
        $region20: #{actor_critic_forward.1} parent=11 // pred_fallthru
          _
      $region12: #{actor_critic_forward.1} parent=5 // pred_fallthru
        _
      %p135 = scmp.lt.s32.totalorder %s10, 2
      // Predicated region
      $region21: #{actor_critic_forward.1} parent=5 // pred_check
        %p136 = pneg %p135
      $region22: #{actor_critic_forward.1} parent=5 // pred_check_branch
        %138 = sbr.rel (%p136) target = $region24
      $region23: #{actor_critic_forward.1} parent=5 // pred_region
        // Predicated region
        $region25: #{actor_critic_forward.1} parent=23 // pred_check
          %p139 = pneg %p30
        $region26: #{actor_critic_forward.1} parent=23 // pred_check_branch
          %141 = sbr.rel (%p139) target = $region28
        $region27: #{actor_critic_forward.1} parent=23 // pred_region
          %s142 = smul.u32 2, %s10
          %p143 = scmp.lt.s32.totalorder %s142, 3
          %s144 = scalar_select %p143, %s142, 3
          %s145 = smul.addr %s144, 4
          %s146 = scalar_lea.vmem %s0, %s145
          %s147 = smul.u32 2, %s10
        $region28: #{actor_critic_forward.1} parent=23 // pred_fallthru
          _
      $region24: #{actor_critic_forward.1} parent=5 // pred_fallthru
        _
      %p148 = scmp.le.s32.totalorder 1, %s10
      %p149 = scmp.lt.s32.totalorder %s10, 3
      %p150 = pnand %p148, %p149
      %p151 = pneg %p150
      // Predicated region
      $region29: #{actor_critic_forward.1} parent=5 // pred_check
        _
      $region30: #{actor_critic_forward.1} parent=5 // pred_check_branch
        %153 = sbr.rel (%p150) target = $region32
      $region31: #{actor_critic_forward.1} parent=5 // pred_region
        %s154 = ssub.s32 %s10, 1
        // Predicated region
        $region33: #{actor_critic_forward.1} parent=31 // pred_check
          %p155 = pneg %p57
        $region34: #{actor_critic_forward.1} parent=31 // pred_check_branch
          %157 = sbr.rel (%p155) target = $region36
        $region35: #{actor_critic_forward.1} parent=31 // pred_region
          %158 = dma.done [#allocation3], 2176
        $region36: #{actor_critic_forward.1} parent=31 // pred_fallthru
          _
        %s159 = smul.u32 2, %s15
        %p160 = scmp.lt.s32.totalorder %s159, 3
        %s161 = scalar_select %p160, %s159, 3
        %s162 = smul.addr %s161, 4
        %s163 = scalar_lea.vmem %s0, %s162
        %p164 = pneg %p36
        %p165 = pneg %p33
        %p166 = pneg %p57
        %p167 = pneg %p54
        %p168 = pneg %p78
        %p169 = pneg %p75
        %p170 = pneg %p104
        %p171 = pneg %p101
        %s172 = smul.u32 2, %s15
        %p173 = scmp.lt.s32.totalorder %s172, 3
        %s174 = scalar_select %p173, %s172, 3
        %s175 = smul.addr %s174, 4
        %s176 = scalar_lea.vmem %s3, %s175
        %s177 = smul.u32 2, %s15
        %p178 = scmp.lt.s32.totalorder %s177, 3
        %s179 = scalar_select %p178, %s177, 3
        %s180 = smul.addr %s179, 4
        %s181 = scalar_lea.vmem %s0, %s180
        %s182 = smul.u32 2, %s15
        %s183 = smul.u32 2, %s15
        %p184 = scmp.lt.s32.totalorder %s183, 3
        %s185 = scalar_select %p184, %s183, 3
        %s186 = smul.addr %s185, 4
        %s187 = scalar_lea.vmem %s3, %s186
        %s188 = smul.u32 2, %s15
        %v190 = vld [vmem:[%s181] sm:$0xf]
        %v191 = vld [vmem:[%s181 + $0x4] sm:$0xf]
        %v192 = vld [vmem:[%s2] sm:$0x7]
        %v193 = vld [vmem:[#allocation2] sm:$0xf]
        %v194 = vld [vmem:[#allocation2 + $0x4] sm:$0xf]
        %v195 = vld [vmem:[#allocation2 + $0x8] sm:$0xf]
        %v196 = vld [vmem:[#allocation2 + $0xc] sm:$0xf]
        %v197 = vld [vmem:[#allocation2 + $0x10] sm:$0xf]
        %v198 = vld [vmem:[#allocation2 + $0x14] sm:$0xf]
        %v199 = vld [vmem:[#allocation2 + $0x18] sm:$0xf]
        %v200 = vld [vmem:[#allocation2 + $0x1c] sm:$0xf]
        %v201 = vld [vmem:[#allocation2 + $0x20] sm:$0xf]
        %v202 = vld [vmem:[#allocation2 + $0x24] sm:$0xf]
        %v203 = vld [vmem:[#allocation2 + $0x28] sm:$0xf]
        %v204 = vld [vmem:[#allocation2 + $0x2c] sm:$0xf]
        %v205 = vld [vmem:[#allocation2 + $0x30] sm:$0xf]
        %v206 = vld [vmem:[#allocation2 + $0x34] sm:$0xf]
        %v207 = vld [vmem:[#allocation2 + $0x38] sm:$0xf]
        %v208 = vld [vmem:[#allocation2 + $0x3c] sm:$0xf]
        %v209 = vld [vmem:[#allocation2 + $0x40] sm:$0xf]
        %v210 = vld [vmem:[#allocation2 + $0x44] sm:$0xf]
        %v211 = vld [vmem:[#allocation2 + $0x48] sm:$0xf]
        %v212 = vld [vmem:[#allocation2 + $0x4c] sm:$0xf]
        %v213 = vld [vmem:[#allocation2 + $0x50] sm:$0xf]
        %v214 = vld [vmem:[#allocation2 + $0x54] sm:$0xf]
        %v215 = vld [vmem:[#allocation2 + $0x58] sm:$0xf]
        %v216 = vld [vmem:[#allocation2 + $0x5c] sm:$0xf]
        %v217 = vld [vmem:[#allocation2 + $0x60] sm:$0xf]
        %v218 = vld [vmem:[#allocation2 + $0x64] sm:$0xf]
        %v219 = vld [vmem:[#allocation2 + $0x68] sm:$0xf]
        %v220 = vld [vmem:[#allocation2 + $0x6c] sm:$0xf]
        %v221 = vld [vmem:[#allocation2 + $0x70] sm:$0xf]
        %v222 = vld [vmem:[#allocation2 + $0x74] sm:$0xf]
        %v223 = vld [vmem:[#allocation2 + $0x78] sm:$0xf]
        %v224 = vld [vmem:[#allocation2 + $0x7c] sm:$0xf]
        %v225 = vld [vmem:[#allocation2 + $0x80] sm:$0xf]
        %v226 = vld [vmem:[#allocation2 + $0x84] sm:$0xf]
        %v227 = vlaneseq
        %v228 = vshrl.u32 %v227, 7
        %v229 = vsub.s32 0, %v228
        %v230 = vrot.slane %v192, %v229
        %v233 = vunpack.c.l.b16 %v190
        %v234 = vunpack.c.l.b16 %v191
        %v235 = vpack.c.b16 %v234, %v233
        %v238 = vunpack.c.l.b16 %v193
        %v239 = vunpack.c.l.b16 %v194
        %v240 = vpack.c.b16 %v239, %v238
        %vm242 = vcmask 130048
        %v244 = vsel %vm242, %v235, 0
        %246 = vmatprep.subr.bf16.mxu0 0
        %247 = vmatpush1.bf16.msra.mxu0 %v240
        %248 = vmatprep.subr.bf16.mxu0 0
        %249 = vmatpush1.bf16.msra.mxu0 0
        %250 = vmatprep.subr.bf16.mxu0 0
        %251 = vmatpush1.bf16.msra.mxu0 0
        %252 = vmatprep.subr.bf16.mxu0 0
        %253 = vmatpush1.bf16.msra.mxu0 0
        %254 = vmatprep.subr.bf16.mxu0 0
        %255 = vmatpush1.bf16.msra.mxu0 0
        %256 = vmatprep.subr.bf16.mxu0 0
        %257 = vmatpush1.bf16.msra.mxu0 0
        %258 = vmatprep.subr.bf16.mxu0 0
        %259 = vmatpush1.bf16.msra.mxu0 0
        %260 = vmatprep.subr.bf16.mxu0 0
        %261 = vmatpush1.bf16.msra.mxu0 0
        %262 = vmatprep.subr.bf16.mxu0 0
        %263 = vmatpush1.bf16.msra.mxu0 0
        %264 = vmatprep.subr.bf16.mxu0 0
        %265 = vmatpush1.bf16.msra.mxu0 0
        %266 = vmatprep.subr.bf16.mxu0 0
        %267 = vmatpush1.bf16.msra.mxu0 0
        %268 = vmatprep.subr.bf16.mxu0 0
        %269 = vmatpush1.bf16.msra.mxu0 0
        %270 = vmatprep.subr.bf16.mxu0 0
        %271 = vmatpush1.bf16.msra.mxu0 0
        %272 = vmatprep.subr.bf16.mxu0 0
        %273 = vmatpush1.bf16.msra.mxu0 0
        %274 = vmatprep.subr.bf16.mxu0 0
        %275 = vmatpush1.bf16.msra.mxu0 0
        %276 = vmatprep.subr.bf16.mxu0 0
        %277 = vmatpush1.bf16.msra.mxu0 0
        %278 = vmatprep.mubr.bf16.mxu0 0
        %279 = vmatmul.mubr.bf16.gmra.mrb[0].mxu0 %v244
        %v280 = vpop.f32.mrb[0].mxu0
        %v281 = vadd.f32 %v230, %v280
        %v282 = vpop.f32.mrb[0].mxu0
        %v283 = vpop.f32.mrb[0].mxu0
        %v284 = vadd.f32 %v230, %v283
        %v285 = vpop.f32.mrb[0].mxu0
        %286 = vdwg.mxu0
        %v287 = vmax.f32 %v281, 0.0
        %v288 = vmax.f32 %v284, 0.0
        %v289 = vpack.c.bf16 %v288, %v287
        %v290 = vlaneseq
        %v291 = vshrl.u32 %v290, 7
        %v292 = vsub.s32 1, %v291
        %v293 = vrot.slane %v192, %v292
        %v310 = vunpack.c.l.b16 %v195
        %v311 = vunpack.c.l.b16 %v196
        %v312 = vunpack.c.l.b16 %v197
        %v313 = vunpack.c.l.b16 %v198
        %v314 = vunpack.c.l.b16 %v199
        %v315 = vunpack.c.l.b16 %v200
        %v316 = vunpack.c.l.b16 %v201
        %v317 = vunpack.c.l.b16 %v202
        %v318 = vunpack.c.l.b16 %v203
        %v319 = vunpack.c.l.b16 %v204
        %v320 = vunpack.c.l.b16 %v205
        %v321 = vunpack.c.l.b16 %v206
        %v322 = vunpack.c.l.b16 %v207
        %v323 = vunpack.c.l.b16 %v208
        %v324 = vunpack.c.l.b16 %v209
        %v325 = vunpack.c.l.b16 %v210
        %v326 = vpack.c.b16 %v311, %v310
        %v327 = vpack.c.b16 %v313, %v312
        %v328 = vpack.c.b16 %v315, %v314
        %v329 = vpack.c.b16 %v317, %v316
        %v330 = vpack.c.b16 %v319, %v318
        %v331 = vpack.c.b16 %v321, %v320
        %v332 = vpack.c.b16 %v323, %v322
        %v333 = vpack.c.b16 %v325, %v324
        %342 = vmatprep.subr.bf16.mxu0 0
        %343 = vmatpush1.bf16.msra.mxu0 %v326
        %344 = vmatprep.subr.bf16.mxu0 0
        %345 = vmatpush1.bf16.msra.mxu0 %v327
        %346 = vmatprep.subr.bf16.mxu0 0
        %347 = vmatpush1.bf16.msra.mxu0 %v328
        %348 = vmatprep.subr.bf16.mxu0 0
        %349 = vmatpush1.bf16.msra.mxu0 %v329
        %350 = vmatprep.subr.bf16.mxu0 0
        %351 = vmatpush1.bf16.msra.mxu0 %v330
        %352 = vmatprep.subr.bf16.mxu0 0
        %353 = vmatpush1.bf16.msra.mxu0 %v331
        %354 = vmatprep.subr.bf16.mxu0 0
        %355 = vmatpush1.bf16.msra.mxu0 %v332
        %356 = vmatprep.subr.bf16.mxu0 0
        %357 = vmatpush1.bf16.msra.mxu0 %v333
        %358 = vmatprep.subr.bf16.mxu0 0
        %359 = vmatpush1.bf16.msra.mxu0 0
        %360 = vmatprep.subr.bf16.mxu0 0
        %361 = vmatpush1.bf16.msra.mxu0 0
        %362 = vmatprep.subr.bf16.mxu0 0
        %363 = vmatpush1.bf16.msra.mxu0 0
        %364 = vmatprep.subr.bf16.mxu0 0
        %365 = vmatpush1.bf16.msra.mxu0 0
        %366 = vmatprep.subr.bf16.mxu0 0
        %367 = vmatpush1.bf16.msra.mxu0 0
        %368 = vmatprep.subr.bf16.mxu0 0
        %369 = vmatpush1.bf16.msra.mxu0 0
        %370 = vmatprep.subr.bf16.mxu0 0
        %371 = vmatpush1.bf16.msra.mxu0 0
        %372 = vmatprep.subr.bf16.mxu0 0
        %373 = vmatpush1.bf16.msra.mxu0 0
        %374 = vmatprep.mubr.bf16.mxu0 0
        %375 = vmatmul.mubr.bf16.gmra.mrb[0].mxu0 %v289
        %v376 = vpop.f32.mrb[0].mxu0
        %v377 = vadd.f32 %v293, %v376
        %v378 = vpop.f32.mrb[0].mxu0
        %v379 = vpop.f32.mrb[0].mxu0
        %v380 = vadd.f32 %v293, %v379
        %v381 = vpop.f32.mrb[0].mxu0
        %382 = vdwg.mxu0
        %v383 = vmax.f32 %v377, 0.0
        %v384 = vmax.f32 %v380, 0.0
        %v385 = vpack.c.bf16 %v384, %v383
        %v386 = vlaneseq
        %v387 = vshrl.u32 %v386, 7
        %v388 = vsub.s32 2, %v387
        %v389 = vrot.slane %v192, %v388
        %v406 = vunpack.c.l.b16 %v211
        %v407 = vunpack.c.l.b16 %v212
        %v408 = vunpack.c.l.b16 %v213
        %v409 = vunpack.c.l.b16 %v214
        %v410 = vunpack.c.l.b16 %v215
        %v411 = vunpack.c.l.b16 %v216
        %v412 = vunpack.c.l.b16 %v217
        %v413 = vunpack.c.l.b16 %v218
        %v414 = vunpack.c.l.b16 %v219
        %v415 = vunpack.c.l.b16 %v220
        %v416 = vunpack.c.l.b16 %v221
        %v417 = vunpack.c.l.b16 %v222
        %v418 = vunpack.c.l.b16 %v223
        %v419 = vunpack.c.l.b16 %v224
        %v420 = vunpack.c.l.b16 %v225
        %v421 = vunpack.c.l.b16 %v226
        %v422 = vpack.c.b16 %v407, %v406
        %v423 = vpack.c.b16 %v409, %v408
        %v424 = vpack.c.b16 %v411, %v410
        %v425 = vpack.c.b16 %v413, %v412
        %v426 = vpack.c.b16 %v415, %v414
        %v427 = vpack.c.b16 %v417, %v416
        %v428 = vpack.c.b16 %v419, %v418
        %v429 = vpack.c.b16 %v421, %v420
        %438 = vmatprep.subr.bf16.mxu0 0
        %439 = vmatpush1.bf16.msra.mxu0 %v422
        %440 = vmatprep.subr.bf16.mxu0 0
        %441 = vmatpush1.bf16.msra.mxu0 %v423
        %442 = vmatprep.subr.bf16.mxu0 0
        %443 = vmatpush1.bf16.msra.mxu0 %v424
        %444 = vmatprep.subr.bf16.mxu0 0
        %445 = vmatpush1.bf16.msra.mxu0 %v425
        %446 = vmatprep.subr.bf16.mxu0 0
        %447 = vmatpush1.bf16.msra.mxu0 %v426
        %448 = vmatprep.subr.bf16.mxu0 0
        %449 = vmatpush1.bf16.msra.mxu0 %v427
        %450 = vmatprep.subr.bf16.mxu0 0
        %451 = vmatpush1.bf16.msra.mxu0 %v428
        %452 = vmatprep.subr.bf16.mxu0 0
        %453 = vmatpush1.bf16.msra.mxu0 %v429
        %454 = vmatprep.subr.bf16.mxu0 0
        %455 = vmatpush1.bf16.msra.mxu0 0
        %456 = vmatprep.subr.bf16.mxu0 0
        %457 = vmatpush1.bf16.msra.mxu0 0
        %458 = vmatprep.subr.bf16.mxu0 0
        %459 = vmatpush1.bf16.msra.mxu0 0
        %460 = vmatprep.subr.bf16.mxu0 0
        %461 = vmatpush1.bf16.msra.mxu0 0
        %462 = vmatprep.subr.bf16.mxu0 0
        %463 = vmatpush1.bf16.msra.mxu0 0
        %464 = vmatprep.subr.bf16.mxu0 0
        %465 = vmatpush1.bf16.msra.mxu0 0
        %466 = vmatprep.subr.bf16.mxu0 0
        %467 = vmatpush1.bf16.msra.mxu0 0
        %468 = vmatprep.subr.bf16.mxu0 0
        %469 = vmatpush1.bf16.msra.mxu0 0
        %470 = vmatprep.mubr.bf16.mxu0 0
        %471 = vmatmul.mubr.bf16.gmra.mrb[0].mxu0 %v385
        %v472 = vpop.f32.mrb[0].mxu0
        %v473 = vadd.f32 %v389, %v472
        %v474 = vpop.f32.mrb[0].mxu0
        %v475 = vpop.f32.mrb[0].mxu0
        %v476 = vadd.f32 %v389, %v475
        %v477 = vpop.f32.mrb[0].mxu0
        %478 = vdwg.mxu0
        %v479 = vlaneseq
        %v480 = vand.u32 %v479, 127
        %vm481 = vcmp.lt.s32.totalorder %v480, 8
        %v482 = vsel %vm481, 1, 0
        %vm483 = vcmp.eq.s32.totalorder %v482, 1
        %v484 = vsel %vm483, %v473, -inf
        %v485 = vsel %vm483, %v476, -inf
        %486 = vmax.xlane.f32.xlu0 %v484
        %v487 = vpop.xlane.xlu0 %486
        %488 = vmax.xlane.f32.xlu0 %v485
        %v489 = vpop.xlane.xlu0 %488
        %v490 = vsub.f32 %v484, %v487
        %v491 = vsub.f32 %v485, %v489
        %v492 = vmul.f32 %v490, 1.442695
        %v493 = vpow.pop %v492
        %v494 = vmul.f32 %v491, 1.442695
        %v495 = vpow.pop %v494
        %496 = vadd.xlane.f32.xlu0 %v493
        %v497 = vpop.xlane.xlu0 %496
        %498 = vadd.xlane.f32.xlu0 %v495
        %v499 = vpop.xlane.xlu0 %498
        %v500 = vrcp.pop %v497
        %v501 = vrcp.pop %v499
        %v502 = vmul.f32 %v497, %v500
        %v503 = vmul.f32 %v499, %v501
        %v504 = vsub.f32 2.0, %v502
        %v505 = vsub.f32 2.0, %v503
        %v506 = vmul.f32 %v500, %v504
        %v507 = vmul.f32 %v501, %v505
        %v508 = vmul.f32 %v497, %v506
        %v509 = vmul.f32 %v499, %v507
        %v510 = vsub.f32 2.0, %v508
        %v511 = vsub.f32 2.0, %v509
        %v512 = vmul.f32 %v506, %v510
        %v513 = vmul.f32 %v507, %v511
        %v514 = vmul.f32 %v493, %v512
        %v515 = vmul.f32 %v495, %v513
        %v516 = vsel %vm483, %v514, %v473
        %v517 = vsel %vm483, %v515, %v476
        %v518 = vpack.c.bf16 %v517, %v516
        %v520 = vunpack.c.l.b16 %v518
        %v521 = vunpack.c.h.b16 %v518
        %v522 = vpack.c.b16 %v520, %v520
        %v523 = vpack.c.b16 %v521, %v521
        %526 = vst [vmem:[%s187] sm:$0xf] %v522
        %527 = vst [vmem:[%s187 + $0x4] sm:$0xf] %v523
        %s528 = smul.u32 2, %s15
        %p529 = scmp.lt.s32.totalorder %s528, 3
        %s530 = scalar_select %p529, %s528, 3
        %s531 = smul.addr %s530, 4
        %s532 = scalar_lea.vmem %s3, %s531
        // Predicated region
        $region37: #{actor_critic_forward.1} parent=31 // pred_check
          %p533 = pneg %p101
        $region38: #{actor_critic_forward.1} parent=31 // pred_check_branch
          %535 = sbr.rel (%p533) target = $region40
        $region39: #{actor_critic_forward.1} parent=31 // pred_region
          %s536 = smul.u32 2, %s15
        $region40: #{actor_critic_forward.1} parent=31 // pred_fallthru
          _
      $region32: #{actor_critic_forward.1} parent=5 // pred_fallthru
        _
      %p537 = scmp.le.s32.totalorder 2, %s10
      // Predicated region
      $region41: #{actor_critic_forward.1} parent=5 // pred_check
        %p538 = pneg %p537
      $region42: #{actor_critic_forward.1} parent=5 // pred_check_branch
        %540 = sbr.rel (%p538) target = $region44
      $region43: #{actor_critic_forward.1} parent=5 // pred_region
        %s541 = ssub.s32 %s10, 2
        // Predicated region
        $region45: #{actor_critic_forward.1} parent=43 // pred_check
          %p542 = pneg %p107
        $region46: #{actor_critic_forward.1} parent=43 // pred_check_branch
          %544 = sbr.rel (%p542) target = $region48
        $region47: #{actor_critic_forward.1} parent=43 // pred_region
          %s545 = smul.u32 2, %s16
          %p546 = scmp.lt.s32.totalorder %s545, 3
          %s547 = scalar_select %p546, %s545, 3
          %s548 = smul.addr %s547, 4
          %s549 = scalar_lea.vmem %s3, %s548
        $region48: #{actor_critic_forward.1} parent=43 // pred_fallthru
          _
      $region44: #{actor_critic_forward.1} parent=5 // pred_fallthru
        _
    $region6: #{actor_critic_forward.1} parent=1 // loop_footer
      %s14 = sadd.s32 1, %s10
    $region7: #{actor_critic_forward.1} parent=1 // loop_footer_branch
      %9 = sbr.rel target = $region3
    $region8: #{actor_critic_forward.1} parent=1 // loop_exit
      _
    %550 = vsyncpa [#allocation3], 1
    %s551 = scalar_lea.sflag [#allocation3], 1
    %552 = vsyncpa %s551, 1

</llo_original>
